<compile_context>
chip_gen: v5e
topology: v5e:2x2
jax: 0.10.0
libtpu: 0.0.40
codegen_flags: <defaults>
</compile_context>

<pallas_src>
import functools

import jax
import jax.numpy as jnp
from jax.experimental import pallas as pl
from jax.experimental.pallas import tpu as pltpu

EPS = 1e-5
VMEM_LIMIT = 32 * 1024 * 1024   # within scoped/physical limits on v5e/v6e/v7x


# ---------------------------------------------------------------------------
# Small helpers
# ---------------------------------------------------------------------------
def _round_up(x, m):
    return ((x + m - 1) // m) * m


def _pick_tile(n, tile_n):
    """Batch tile: multiple of 8 (or == n for tiny n); >=2 grid steps whenever
    possible so both v7x TensorCores get work under 'parallel' semantics."""
    tile_n = max(8, (tile_n // 8) * 8)          # never fall back to tn = n silently
    if n <= 8:
        return n                                # single tiny block (== full dim)
    if n <= 2 * tile_n:
        return min(tile_n, _round_up(pl.cdiv(n, 2), 8))
    return tile_n


def _maybe_bf16(w, use_bf16):
    return w.astype(jnp.bfloat16) if use_bf16 else w


def _pad_rows(x, n_pad):
    n = x.shape[0]
    return x if n_pad == n else jnp.pad(x, ((0, n_pad - n), (0, 0)))


def _pad_cols(w, c_pad):
    c = w.shape[1]
    return w if c_pad == c else jnp.pad(w, ((0, 0), (0, c_pad - c)))


# ---------------------------------------------------------------------------
# Kernels
# ---------------------------------------------------------------------------
def _mlp_kernel(x_ref, w1_ref, b1_ref, w2_ref, b2_ref, w3_ref, b3_ref, o_ref):
    """Default QNetwork: Linear -> ReLU -> Linear -> ReLU -> Linear, fused."""
    x = x_ref[...].astype(jnp.float32)
    h = jnp.dot(x.astype(w1_ref.dtype), w1_ref[...],
                preferred_element_type=jnp.float32) + b1_ref[...]
    h = jnp.maximum(h, 0.0)
    h = jnp.dot(h.astype(w2_ref.dtype), w2_ref[...],
                preferred_element_type=jnp.float32) + b2_ref[...]
    h = jnp.maximum(h, 0.0)
    y = jnp.dot(h.astype(w3_ref.dtype), w3_ref[...],
                preferred_element_type=jnp.float32) + b3_ref[...]
    o_ref[...] = y.astype(o_ref.dtype)


def _mlp_affine_kernel(x_ref,
                       w1_ref, b1_ref, s1_ref, t1_ref,
                       w2_ref, b2_ref, s2_ref, t2_ref,
                       w3_ref, b3_ref, o_ref):
    """Eval-mode BN folded into per-feature scale/shift FMAs (f32 epilogue)."""
    x = x_ref[...].astype(jnp.float32)
    h = jnp.dot(x.astype(w1_ref.dtype), w1_ref[...],
                preferred_element_type=jnp.float32) + b1_ref[...]
    h = jnp.maximum(h * s1_ref[...] + t1_ref[...], 0.0)
    h = jnp.dot(h.astype(w2_ref.dtype), w2_ref[...],
                preferred_element_type=jnp.float32) + b2_ref[...]
    h = jnp.maximum(h * s2_ref[...] + t2_ref[...], 0.0)
    y = jnp.dot(h.astype(w3_ref.dtype), w3_ref[...],
                preferred_element_type=jnp.float32) + b3_ref[...]
    o_ref[...] = y.astype(o_ref.dtype)


def _linear_stats_kernel(x_ref, w_ref, b_ref, h_ref, sum_ref, sq_ref,
                         *, n_true, tn):
    """h = x@W+b; emit h tile; accumulate masked, bias-shifted sum / sum-sq."""
    i = pl.program_id(0)

    @pl.when(i == 0)
    def _():
        sum_ref[...] = jnp.zeros_like(sum_ref)
        sq_ref[...] = jnp.zeros_like(sq_ref)

    x = x_ref[...].astype(jnp.float32)
    h = jnp.dot(x.astype(w_ref.dtype), w_ref[...],
                preferred_element_type=jnp.float32) + b_ref[...]
    h_ref[...] = h.astype(h_ref.dtype)

    rows = jax.lax.broadcasted_iota(jnp.int32, (tn, 1), 0) + i * tn
    valid = rows < n_true                                   # mask padded rows
    hc = jnp.where(valid, h - b_ref[...], 0.0)              # shifted one-pass stats
    sum_ref[...] += jnp.sum(hc, axis=0, keepdims=True)
    sq_ref[...] += jnp.sum(hc * hc, axis=0, keepdims=True)


def _bn_linear_stats_kernel(h_ref, s_ref, t_ref, w_ref, b_ref,
                            h2_ref, sum_ref, sq_ref, *, n_true, tn):
    """a = relu(h*scale+shift); h2 = a@W+b; emit h2; accumulate masked stats."""
    i = pl.program_id(0)

    @pl.when(i == 0)
    def _():
        sum_ref[...] = jnp.zeros_like(sum_ref)
        sq_ref[...] = jnp.zeros_like(sq_ref)

    a = jnp.maximum(h_ref[...].astype(jnp.float32) * s_ref[...] + t_ref[...], 0.0)
    h2 = jnp.dot(a.astype(w_ref.dtype), w_ref[...],
                 preferred_element_type=jnp.float32) + b_ref[...]
    h2_ref[...] = h2.astype(h2_ref.dtype)

    rows = jax.lax.broadcasted_iota(jnp.int32, (tn, 1), 0) + i * tn
    valid = rows < n_true
    hc = jnp.where(valid, h2 - b_ref[...], 0.0)
    sum_ref[...] += jnp.sum(hc, axis=0, keepdims=True)
    sq_ref[...] += jnp.sum(hc * hc, axis=0, keepdims=True)


def _bn_linear_kernel(h_ref, s_ref, t_ref, w_ref, b_ref, o_ref):
    """a = relu(h*scale+shift); y = a@W+b."""
    a = jnp.maximum(h_ref[...].astype(jnp.float32) * s_ref[...] + t_ref[...], 0.0)
    y = jnp.dot(a.astype(w_ref.dtype), w_ref[...],
                preferred_element_type=jnp.float32) + b_ref[...]
    o_ref[...] = y.astype(o_ref.dtype)


# ---------------------------------------------------------------------------
# Wrappers
# ---------------------------------------------------------------------------
def qnetwork_forward(state, params, *, tile_n=2048, use_bf16=True, pad_out=True):
    """Default QNetwork forward. state: (N, in_dim) or (in_dim,), f32."""
    squeeze = state.ndim == 1
    x = state.reshape(1, -1) if squeeze else state
    n, in_dim = x.shape
    w1, b1, w2, b2, w3, b3 = params                 # w: (in, out), b: (1, out)
    f1, f2, out_dim = w1.shape[1], w2.shape[1], w3.shape[1]

    tn = _pick_tile(n, tile_n)
    n_pad = _round_up(n, tn)
    x_p = _pad_rows(x, n_pad)

    out_pad = _round_up(out_dim, 128) if pad_out else out_dim   # lane-dense store
    w3p, b3p = _pad_cols(w3, out_pad), _pad_cols(b3, out_pad)
    w1c, w2c, w3c = (_maybe_bf16(w, use_bf16) for w in (w1, w2, w3p))

    const = lambda i: (0, 0)                        # weights/biases stay resident
    out = pl.pallas_call(
        _mlp_kernel,
        out_shape=jax.ShapeDtypeStruct((n_pad, out_pad), x.dtype),
        grid=(n_pad // tn,),
        in_specs=[
            pl.BlockSpec((tn, in_dim), lambda i: (i, 0)),
            pl.BlockSpec((in_dim, f1), const), pl.BlockSpec((1, f1), const),
            pl.BlockSpec((f1, f2), const), pl.BlockSpec((1, f2), const),
            pl.BlockSpec((f2, out_pad), const), pl.BlockSpec((1, out_pad), const),
        ],
        out_specs=pl.BlockSpec((tn, out_pad), lambda i: (i, 0)),
        compiler_params=pltpu.CompilerParams(
            dimension_semantics=("parallel",),
            vmem_limit_bytes=VMEM_LIMIT),
    )(x_p, w1c, b1, w2c, b2, w3c, b3p)

    out = out[:n, :out_dim]
    return out.reshape(out_dim) if squeeze else out


def qnetwork_bn_forward(state, params, bn_params, *, tile_n=2048,
                        use_bf16=True, pad_out=True):
    """Config-style QNetwork with BatchNormWrapper after each hidden Linear.

    2-D input -> training-mode BN (batch-tiled 3-pass with streamed stats).
    1-D input -> eval-mode BN (running stats folded into scale/shift, 1 call).
    """
    w1, b1, w2, b2, w3, b3 = params
    (g1, be1, rm1, rv1), (g2, be2, rm2, rv2) = bn_params
    f1, f2, out_dim = w1.shape[1], w2.shape[1], w3.shape[1]

    squeeze = state.ndim == 1
    training = not squeeze          # mirrors BatchNormWrapper: 1-D -> eval mode
    x = state.reshape(1, -1) if squeeze else state
    n, in_dim = x.shape

    tn = _pick_tile(n, tile_n)
    n_pad = _round_up(n, tn)
    x_p = _pad_rows(x, n_pad)

    out_pad = _round_up(out_dim, 128) if pad_out else out_dim
    w3p, b3p = _pad_cols(w3, out_pad), _pad_cols(b3, out_pad)
    w1c, w2c, w3c = (_maybe_bf16(w, use_bf16) for w in (w1, w2, w3p))

    const = lambda i: (0, 0)
    row_spec = lambda width: pl.BlockSpec((tn, width), lambda i: (i, 0))
    vec_spec = lambda width: pl.BlockSpec((1, width), const)
    grid = (n_pad // tn,)

    if not training:
        # Eval: fold running stats into one per-feature scale/shift FMA.
        s1 = (g1 * jax.lax.rsqrt(rv1 + EPS)).reshape(1, f1)
        t1 = (be1 - rm1 * s1[0]).reshape(1, f1)
        s2 = (g2 * jax.lax.rsqrt(rv2 + EPS)).reshape(1, f2)
        t2 = (be2 - rm2 * s2[0]).reshape(1, f2)
        out = pl.pallas_call(
            _mlp_affine_kernel,
            out_shape=jax.ShapeDtypeStruct((n_pad, out_pad), x.dtype),
            grid=grid,
            in_specs=[
                row_spec(in_dim),
                pl.BlockSpec((in_dim, f1), const), vec_spec(f1), vec_spec(f1), vec_spec(f1),
                pl.BlockSpec((f1, f2), const), vec_spec(f2), vec_spec(f2), vec_spec(f2),
                pl.BlockSpec((f2, out_pad), const), vec_spec(out_pad),
            ],
            out_specs=row_spec(out_pad),
            compiler_params=pltpu.CompilerParams(
                dimension_semantics=("parallel",),
                vmem_limit_bytes=VMEM_LIMIT),
        )(x_p, w1c, b1, s1, t1, w2c, b2, s2, t2, w3c, b3p)
        out = out[:n, :out_dim]
        return out.reshape(out_dim) if squeeze else out

    # ---- Training-mode BatchNorm1d: batch-tiled, stats streamed per tile ----
    reduce_params = pltpu.CompilerParams(
        dimension_semantics=("arbitrary",), vmem_limit_bytes=VMEM_LIMIT)

    def finalize(sum_c, sq_c, bias, gamma, beta):
        mean_c = sum_c[0] / n                              # mean of (h - bias)
        var = jnp.maximum(sq_c[0] / n - mean_c * mean_c, 0.0)
        mean = mean_c + bias[0]
        scale = gamma * jax.lax.rsqrt(var + EPS)
        shift = beta - mean * scale
        return scale.reshape(1, -1), shift.reshape(1, -1)

    # Pass 1: h1 = x @ W1 + b1, plus per-feature batch statistics.
    h1, sum1, sq1 = pl.pallas_call(
        functools.partial(_linear_stats_kernel, n_true=n, tn=tn),
        out_shape=(jax.ShapeDtypeStruct((n_pad, f1), jnp.float32),
                   jax.ShapeDtypeStruct((1, f1), jnp.float32),
                   jax.ShapeDtypeStruct((1, f1), jnp.float32)),
        grid=grid,
        in_specs=[row_spec(in_dim),
                  pl.BlockSpec((in_dim, f1), const), vec_spec(f1)],
        out_specs=(row_spec(f1), vec_spec(f1), vec_spec(f1)),
        compiler_params=reduce_params,
    )(x_p, w1c, b1)
    s1, t1 = finalize(sum1, sq1, b1, g1, be1)

    # Pass 2: h2 = relu(BN1(h1)) @ W2 + b2, plus statistics for BN2.
    h2, sum2, sq2 = pl.pallas_call(
        functools.partial(_bn_linear_stats_kernel, n_true=n, tn=tn),
        out_shape=(jax.ShapeDtypeStruct((n_pad, f2), jnp.float32),
                   jax.ShapeDtypeStruct((1, f2), jnp.float32),
                   jax.ShapeDtypeStruct((1, f2), jnp.float32)),
        grid=grid,
        in_specs=[row_spec(f1), vec_spec(f1), vec_spec(f1),
                  pl.BlockSpec((f1, f2), const), vec_spec(f2)],
        out_specs=(row_spec(f2), vec_spec(f2), vec_spec(f2)),
        compiler_params=reduce_params,
    )(h1, s1, t1, w2c, b2)
    s2, t2 = finalize(sum2, sq2, b2, g2, be2)

    # Pass 3: y = relu(BN2(h2)) @ W3 + b3 (fully parallel over batch tiles).
    out = pl.pallas_call(
        _bn_linear_kernel,
        out_shape=jax.ShapeDtypeStruct((n_pad, out_pad), x.dtype),
        grid=grid,
        in_specs=[row_spec(f2), vec_spec(f2), vec_spec(f2),
                  pl.BlockSpec((f2, out_pad), const), vec_spec(out_pad)],
        out_specs=row_spec(out_pad),
        compiler_params=pltpu.CompilerParams(
            dimension_semantics=("parallel",),
            vmem_limit_bytes=VMEM_LIMIT),
    )(h2, s2, t2, w3c, b3p)

    out = out[:n, :out_dim]
    return out.reshape(out_dim) if squeeze else out


# ---------------------------------------------------------------------------
# Plain-JAX references (mirror the kernel's bf16 cast points when requested)
# ---------------------------------------------------------------------------
def _cast_in(x, use_bf16):
    return x.astype(jnp.bfloat16) if use_bf16 else x


def _ref_linear(x, w, b, use_bf16):
    return jnp.dot(_cast_in(x, use_bf16), _cast_in(w, use_bf16),
                   preferred_element_type=jnp.float32) + b[0]


def _ref_mlp(x, params, use_bf16=False):
    w1, b1, w2, b2, w3, b3 = params
    h = jnp.maximum(_ref_linear(x, w1, b1, use_bf16), 0.0)
    h = jnp.maximum(_ref_linear(h, w2, b2, use_bf16), 0.0)
    return _ref_linear(h, w3, b3, use_bf16)


def _ref_bn(h, gamma, beta, rm, rv, training):
    if training:
        mean = jnp.mean(h, axis=0)
        var = jnp.mean((h - mean) ** 2, axis=0)     # biased var, like torch BN
    else:
        mean, var = rm, rv
    return (h - mean) / jnp.sqrt(var + EPS) * gamma + beta


def _ref_mlp_bn(x, params, bn_params, training, use_bf16=False):
    w1, b1, w2, b2, w3, b3 = params
    (g1, be1, rm1, rv1), (g2, be2, rm2, rv2) = bn_params
    x2 = x if x.ndim == 2 else x.reshape(1, -1)
    h = _ref_linear(x2, w1, b1, use_bf16)
    h = jnp.maximum(_ref_bn(h, g1, be1, rm1, rv1, training), 0.0)
    h = _ref_linear(h, w2, b2, use_bf16)
    h = jnp.maximum(_ref_bn(h, g2, be2, rm2, rv2, training), 0.0)
    y = _ref_linear(h, w3, b3, use_bf16)
    return y if x.ndim == 2 else y.reshape(-1)


# ---------------------------------------------------------------------------
# Demo / correctness check
# ---------------------------------------------------------------------------
if __name__ == "__main__":
    input_dim, hidden, output_dim = 8, 128, 4

    key = jax.random.PRNGKey(0)
    ks = jax.random.split(key, 18)

    def init_linear(kw, kb, fan_in, fan_out):
        bound = 1.0 / (fan_in ** 0.5)
        w = jax.random.uniform(kw, (fan_in, fan_out), jnp.float32, -bound, bound)
        b = jax.random.uniform(kb, (1, fan_out), jnp.float32, -bound, bound)
        return w, b

    w1, b1 = init_linear(ks[0], ks[1], input_dim, hidden)
    w2, b2 = init_linear(ks[2], ks[3], hidden, hidden)
    w3, b3 = init_linear(ks[4], ks[5], hidden, output_dim)
    params = (w1, b1, w2, b2, w3, b3)

    def init_bn(kg, kb, km, kv, f):
        gamma = 1.0 + 0.1 * jax.random.normal(kg, (f,), jnp.float32)
        beta = 0.1 * jax.random.normal(kb, (f,), jnp.float32)
        rm = 0.1 * jax.random.normal(km, (f,), jnp.float32)
        rv = 1.0 + 0.1 * jax.random.uniform(kv, (f,), jnp.float32)
        return gamma, beta, rm, rv

    bn_params = (init_bn(ks[6], ks[7], ks[8], ks[9], hidden),
                 init_bn(ks[10], ks[11], ks[12], ks[13], hidden))

    x_small = jax.random.normal(ks[14], (4, input_dim), jnp.float32)
    x_multi = jax.random.normal(ks[15], (20, input_dim), jnp.float32)  # 2 tiles + padding
    x_1d = jax.random.normal(ks[16], (input_dim,), jnp.float32)

    def check(got, want, tol, msg):
        got = jax.block_until_ready(got)
        assert got.shape == want.shape, f"{msg}: shape {got.shape} vs {want.shape}"
        err = float(jnp.max(jnp.abs(got - want)))
        assert jnp.allclose(got, want, atol=tol, rtol=tol), f"{msg}: max err {err}"

    # 1) Plain MLP, f32 path (tight tolerance).
    check(qnetwork_forward(x_small, params, use_bf16=False),
          _ref_mlp(x_small, params, use_bf16=False), 1e-4, "MLP f32 2D")

    # 2) Plain MLP, bf16 matmul inputs, multi-tile batch with row padding.
    check(qnetwork_forward(x_multi, params, use_bf16=True),
          _ref_mlp(x_multi, params, use_bf16=True), 2e-2, "MLP bf16 multi-tile")

    # 3) Plain MLP, 1-D state (N=1 path; launch-latency bound by nature).
    check(qnetwork_forward(x_1d, params, use_bf16=False),
          _ref_mlp(x_1d, params, use_bf16=False), 1e-4, "MLP f32 1D")

    # 4) BN training path, f32, multi-tile batch (masked streamed statistics).
    check(qnetwork_bn_forward(x_multi, params, bn_params, use_bf16=False),
          _ref_mlp_bn(x_multi, params, bn_params, True, use_bf16=False),
          1e-4, "BN train f32")

    # 5) BN training path, bf16 matmul inputs.
    check(qnetwork_bn_forward(x_small, params, bn_params, use_bf16=True),
          _ref_mlp_bn(x_small, params, bn_params, True, use_bf16=True),
          2e-2, "BN train bf16")

    # 6) BN eval path (1-D input), f32.
    check(qnetwork_bn_forward(x_1d, params, bn_params, use_bf16=False),
          _ref_mlp_bn(x_1d, params, bn_params, False, use_bf16=False),
          1e-4, "BN eval f32 1D")

    print("KERNEL_OK")
</pallas_src>

<mosaic_0001>
module attributes {stable_mosaic.version = 11 : i64} {
  func.func @_mlp_kernel(%arg0: i32, %arg1: memref<4x8xf32, #tpu.memory_space<vmem>>, %arg2: memref<8x128xf32, #tpu.memory_space<vmem>>, %arg3: memref<1x128xf32, #tpu.memory_space<vmem>>, %arg4: memref<128x128xf32, #tpu.memory_space<vmem>>, %arg5: memref<1x128xf32, #tpu.memory_space<vmem>>, %arg6: memref<128x128xf32, #tpu.memory_space<vmem>>, %arg7: memref<1x128xf32, #tpu.memory_space<vmem>>, %arg8: memref<4x128xf32, #tpu.memory_space<vmem>>) attributes {dimension_semantics = [#tpu.dimension_semantics<parallel>], iteration_bounds = array<i64: 1>, scalar_prefetch = 0 : i64, scratch_operands = 0 : i64, tpu.core_type = #tpu.core_type<tc>, window_params = [{transform_indices = @transform_0, window_bounds = array<i64: 4, 8>}, {pipeline_mode = #tpu.pipeline_mode<synchronous>, transform_indices = @transform_1, window_bounds = array<i64: 8, 128>}, {pipeline_mode = #tpu.pipeline_mode<synchronous>, transform_indices = @transform_2, window_bounds = array<i64: 1, 128>}, {pipeline_mode = #tpu.pipeline_mode<synchronous>, transform_indices = @transform_3, window_bounds = array<i64: 128, 128>}, {pipeline_mode = #tpu.pipeline_mode<synchronous>, transform_indices = @transform_4, window_bounds = array<i64: 1, 128>}, {pipeline_mode = #tpu.pipeline_mode<synchronous>, transform_indices = @transform_5, window_bounds = array<i64: 128, 128>}, {pipeline_mode = #tpu.pipeline_mode<synchronous>, transform_indices = @transform_6, window_bounds = array<i64: 1, 128>}, {transform_indices = @transform_7, window_bounds = array<i64: 4, 128>}]} {
    %c0 = arith.constant 0 : index
    %c0_0 = arith.constant 0 : index
    %0 = vector.load %arg1[%c0, %c0_0] : memref<4x8xf32, #tpu.memory_space<vmem>>, vector<4x8xf32>
    %c0_1 = arith.constant 0 : index
    %c0_2 = arith.constant 0 : index
    %1 = vector.load %arg2[%c0_1, %c0_2] : memref<8x128xf32, #tpu.memory_space<vmem>>, vector<8x128xf32>
    %cst = arith.constant dense<0.000000e+00> : vector<4x128xf32>
    %2 = tpu.matmul %0, %1, %cst {dimension_numbers = #tpu.dot_dimension_numbers<[1], [0], [0], [1], [0, 0, 1, 1], [], []>} : vector<4x8xf32>, vector<8x128xf32>, vector<4x128xf32> -> vector<4x128xf32>
    %c0_3 = arith.constant 0 : index
    %c0_4 = arith.constant 0 : index
    %3 = vector.load %arg3[%c0_3, %c0_4] : memref<1x128xf32, #tpu.memory_space<vmem>>, vector<1x128xf32>
    %4 = vector.broadcast %3 : vector<1x128xf32> to vector<4x128xf32>
    %5 = arith.addf %2, %4 : vector<4x128xf32>
    %cst_5 = arith.constant 0.000000e+00 : f32
    %6 = vector.broadcast %cst_5 : f32 to vector<4x128xf32>
    %7 = arith.maximumf %5, %6 : vector<4x128xf32>
    %c0_6 = arith.constant 0 : index
    %c0_7 = arith.constant 0 : index
    %8 = vector.load %arg4[%c0_6, %c0_7] : memref<128x128xf32, #tpu.memory_space<vmem>>, vector<128x128xf32>
    %cst_8 = arith.constant dense<0.000000e+00> : vector<4x128xf32>
    %9 = tpu.matmul %7, %8, %cst_8 {dimension_numbers = #tpu.dot_dimension_numbers<[1], [0], [0], [1], [0, 0, 1, 1], [], []>} : vector<4x128xf32>, vector<128x128xf32>, vector<4x128xf32> -> vector<4x128xf32>
    %c0_9 = arith.constant 0 : index
    %c0_10 = arith.constant 0 : index
    %10 = vector.load %arg5[%c0_9, %c0_10] : memref<1x128xf32, #tpu.memory_space<vmem>>, vector<1x128xf32>
    %11 = vector.broadcast %10 : vector<1x128xf32> to vector<4x128xf32>
    %12 = arith.addf %9, %11 : vector<4x128xf32>
    %cst_11 = arith.constant 0.000000e+00 : f32
    %13 = vector.broadcast %cst_11 : f32 to vector<4x128xf32>
    %14 = arith.maximumf %12, %13 : vector<4x128xf32>
    %c0_12 = arith.constant 0 : index
    %c0_13 = arith.constant 0 : index
    %15 = vector.load %arg6[%c0_12, %c0_13] : memref<128x128xf32, #tpu.memory_space<vmem>>, vector<128x128xf32>
    %cst_14 = arith.constant dense<0.000000e+00> : vector<4x128xf32>
    %16 = tpu.matmul %14, %15, %cst_14 {dimension_numbers = #tpu.dot_dimension_numbers<[1], [0], [0], [1], [0, 0, 1, 1], [], []>} : vector<4x128xf32>, vector<128x128xf32>, vector<4x128xf32> -> vector<4x128xf32>
    %c0_15 = arith.constant 0 : index
    %c0_16 = arith.constant 0 : index
    %17 = vector.load %arg7[%c0_15, %c0_16] : memref<1x128xf32, #tpu.memory_space<vmem>>, vector<1x128xf32>
    %18 = vector.broadcast %17 : vector<1x128xf32> to vector<4x128xf32>
    %19 = arith.addf %16, %18 : vector<4x128xf32>
    %c0_17 = arith.constant 0 : index
    %c0_18 = arith.constant 0 : index
    %20 = vector.load %arg8[%c0_17, %c0_18] : memref<4x128xf32, #tpu.memory_space<vmem>>, vector<4x128xf32>
    tpu.vector_store %arg8[%c0_17, %c0_18], %19 {strides = array<i32>} : memref<4x128xf32, #tpu.memory_space<vmem>>, vector<4x128xf32>,
    return
  }
  func.func @transform_0(%arg0: i32) -> (i32, i32) {
    %c0_i32 = arith.constant 0 : i32
    %c0_i32_0 = arith.constant 0 : i32
    return %arg0, %c0_i32 : i32, i32
  }
  func.func @transform_1(%arg0: i32) -> (i32, i32) {
    %c0_i32 = arith.constant 0 : i32
    %c0_i32_0 = arith.constant 0 : i32
    %c0_i32_1 = arith.constant 0 : i32
    return %c0_i32, %c0_i32_0 : i32, i32
  }
  func.func @transform_2(%arg0: i32) -> (i32, i32) {
    %c0_i32 = arith.constant 0 : i32
    %c0_i32_0 = arith.constant 0 : i32
    %c0_i32_1 = arith.constant 0 : i32
    return %c0_i32, %c0_i32_0 : i32, i32
  }
  func.func @transform_3(%arg0: i32) -> (i32, i32) {
    %c0_i32 = arith.constant 0 : i32
    %c0_i32_0 = arith.constant 0 : i32
    %c0_i32_1 = arith.constant 0 : i32
    return %c0_i32, %c0_i32_0 : i32, i32
  }
  func.func @transform_4(%arg0: i32) -> (i32, i32) {
    %c0_i32 = arith.constant 0 : i32
    %c0_i32_0 = arith.constant 0 : i32
    %c0_i32_1 = arith.constant 0 : i32
    return %c0_i32, %c0_i32_0 : i32, i32
  }
  func.func @transform_5(%arg0: i32) -> (i32, i32) {
    %c0_i32 = arith.constant 0 : i32
    %c0_i32_0 = arith.constant 0 : i32
    %c0_i32_1 = arith.constant 0 : i32
    return %c0_i32, %c0_i32_0 : i32, i32
  }
  func.func @transform_6(%arg0: i32) -> (i32, i32) {
    %c0_i32 = arith.constant 0 : i32
    %c0_i32_0 = arith.constant 0 : i32
    %c0_i32_1 = arith.constant 0 : i32
    return %c0_i32, %c0_i32_0 : i32, i32
  }
  func.func @transform_7(%arg0: i32) -> (i32, i32) {
    %c0_i32 = arith.constant 0 : i32
    %c0_i32_0 = arith.constant 0 : i32
    return %arg0, %c0_i32 : i32, i32
  }
}

</mosaic_0001>

<llo_original>
// kernel: tpu_custom_call.1
$region0: #{tpu_custom_call.1}
  #allocation0 [shape = 'u32[]', space=smem, size = 0x4, offset = 0x4, fixed_abs, tag = 'smem constant byte address 0x4 - core index']
  #allocation1 [shape = 'u32[72,128]{1,0:T(1,128)}', space=vmem, size = 0x9000, scoped, tag = 'internal scratch']
  %s0 = inlined_call_operand.hbm [shape: f32[4,8], index: 0, kind: input, shape index: {}]
  %s1 = inlined_call_operand.hbm [shape: f32[8,128], index: 1, kind: input, shape index: {}]
  %s2 = inlined_call_operand.vmem [shape: f32[1,128], index: 2, kind: input, shape index: {}]
  %s3 = inlined_call_operand.hbm [shape: f32[128,128], index: 3, kind: input, shape index: {}]
  %s4 = inlined_call_operand.vmem [shape: f32[1,128], index: 4, kind: input, shape index: {}]
  %s5 = inlined_call_operand.hbm [shape: f32[128,128], index: 5, kind: input, shape index: {}]
  %s6 = inlined_call_operand.vmem [shape: f32[1,128], index: 6, kind: input, shape index: {}]
  %s7 = inlined_call_operand.hbm [shape: f32[4,128], index: 7, kind: output, shape index: {}]
  %s8 = sld [smem:[#allocation0]]
  $region54: #{tpu_custom_call.1} parent=0
    _
  %s10 = ssub.s32 1, %s8
  %s11 = scalar_select 0, %s10, %s8
  $region1: #{tpu_custom_call.1} parent=0
    #allocation2 [shape = 'u8[2048]{0}', space=vmem, size = 0x800, scoped, tag = 'input window, operand 0, single buffered']
    #allocation3 [shape = 's32[1]{0}', space=sflag, size = 0x4, scoped, tag = 'scoped memory for tpu_custom_call.1']
    #allocation4 [shape = 's32[1]{0}', space=sflag, size = 0x4, scoped, tag = 'scoped memory for tpu_custom_call.1']
    #allocation5 [shape = 'u8[4096]{0}', space=vmem, size = 0x1000, scoped, tag = 'input window, operand 1, single buffered']
    #allocation6 [shape = 's32[1]{0}', space=sflag, size = 0x4, scoped, tag = 'scoped memory for tpu_custom_call.1']
    #allocation7 [shape = 'u8[65536]{0}', space=vmem, size = 0x10000, scoped, tag = 'input window, operand 3, single buffered']
    #allocation8 [shape = 'u8[65536]{0}', space=vmem, size = 0x10000, scoped, tag = 'input window, operand 5, single buffered']
    #allocation9 [shape = 's32[1]{0}', space=sflag, size = 0x4, scoped, tag = 'scoped memory for tpu_custom_call.1']
    #allocation10 [shape = 'u8[2048]{0}', space=vmem, size = 0x800, scoped, tag = 'output window, operand 0, single buffered']
    %12 = vsyncpa [#allocation3], 0
    %13 = vsyncpa [#allocation6], 0
    %14 = vsyncpa [#allocation9], 0
    %15 = vsyncpa [#allocation4], 0
    // Predicated region
    $region2: #{tpu_custom_call.1} parent=1 // pred_check
      _
    $region3: #{tpu_custom_call.1} parent=1 // pred_check_branch
      %17 = sbr.rel (0) target = $region5
    $region4: #{tpu_custom_call.1} parent=1 // pred_region
      %19 = vsyncadd [#allocation3], 0
      %s21 = sshll.u32 %s0, 4
      %s22 = int_to_ptr.hbm [resolvable:$true] %s21
      %s23 = sshll.u32 [#allocation2], 4
      %s24 = int_to_ptr.vmem [resolvable:$true] %s23
      %26 = dma.hbm_to_vmem [thread:$0]  %s22, 64, %s24, [#allocation3]
    $region5: #{tpu_custom_call.1} parent=1 // pred_fallthru
      _
    // Predicated region
    $region6: #{tpu_custom_call.1} parent=1 // pred_check
      _
    $region7: #{tpu_custom_call.1} parent=1 // pred_check_branch
      %28 = sbr.rel (0) target = $region9
    $region8: #{tpu_custom_call.1} parent=1 // pred_region
      %30 = vsyncadd [#allocation6], 0
      %s32 = sshll.u32 %s1, 4
      %s33 = int_to_ptr.hbm [resolvable:$true] %s32
      %s34 = sshll.u32 [#allocation5], 4
      %s35 = int_to_ptr.vmem [resolvable:$true] %s34
      %37 = dma.hbm_to_vmem [thread:$0]  %s33, 128, %s35, [#allocation6]
    $region9: #{tpu_custom_call.1} parent=1 // pred_fallthru
      _
    // Predicated region
    $region10: #{tpu_custom_call.1} parent=1 // pred_check
      _
    $region11: #{tpu_custom_call.1} parent=1 // pred_check_branch
      %39 = sbr.rel (0) target = $region13
    $region12: #{tpu_custom_call.1} parent=1 // pred_region
      _
    $region13: #{tpu_custom_call.1} parent=1 // pred_fallthru
      _
    // Predicated region
    $region14: #{tpu_custom_call.1} parent=1 // pred_check
      _
    $region15: #{tpu_custom_call.1} parent=1 // pred_check_branch
      %41 = sbr.rel (0) target = $region17
    $region16: #{tpu_custom_call.1} parent=1 // pred_region
      %43 = vsyncadd [#allocation6], 0
      %s44 = sshll.u32 %s3, 4
      %s45 = int_to_ptr.hbm [resolvable:$true] %s44
      %s46 = sshll.u32 [#allocation7], 4
      %s47 = int_to_ptr.vmem [resolvable:$true] %s46
      %52 = dma.hbm_to_vmem [thread:$0]  %s45, 2048, %s47, [#allocation6], 128, 128, 8
    $region17: #{tpu_custom_call.1} parent=1 // pred_fallthru
      _
    // Predicated region
    $region18: #{tpu_custom_call.1} parent=1 // pred_check
      _
    $region19: #{tpu_custom_call.1} parent=1 // pred_check_branch
      %54 = sbr.rel (0) target = $region21
    $region20: #{tpu_custom_call.1} parent=1 // pred_region
      _
    $region21: #{tpu_custom_call.1} parent=1 // pred_fallthru
      _
    // Predicated region
    $region22: #{tpu_custom_call.1} parent=1 // pred_check
      _
    $region23: #{tpu_custom_call.1} parent=1 // pred_check_branch
      %56 = sbr.rel (0) target = $region25
    $region24: #{tpu_custom_call.1} parent=1 // pred_region
      %58 = vsyncadd [#allocation9], 0
      %s59 = sshll.u32 %s5, 4
      %s60 = int_to_ptr.hbm [resolvable:$true] %s59
      %s61 = sshll.u32 [#allocation8], 4
      %s62 = int_to_ptr.vmem [resolvable:$true] %s61
      %67 = dma.hbm_to_vmem [thread:$0]  %s60, 2048, %s62, [#allocation9], 128, 128, 8
    $region25: #{tpu_custom_call.1} parent=1 // pred_fallthru
      _
    // Predicated region
    $region26: #{tpu_custom_call.1} parent=1 // pred_check
      _
    $region27: #{tpu_custom_call.1} parent=1 // pred_check_branch
      %69 = sbr.rel (0) target = $region29
    $region28: #{tpu_custom_call.1} parent=1 // pred_region
      _
    $region29: #{tpu_custom_call.1} parent=1 // pred_fallthru
      _
    // Predicated region
    $region30: #{tpu_custom_call.1} parent=1 // pred_check
      _
    $region31: #{tpu_custom_call.1} parent=1 // pred_check_branch
      %71 = sbr.rel (0) target = $region33
    $region32: #{tpu_custom_call.1} parent=1 // pred_region
      %73 = dma.done [#allocation3], 64
    $region33: #{tpu_custom_call.1} parent=1 // pred_fallthru
      _
    // Predicated region
    $region34: #{tpu_custom_call.1} parent=1 // pred_check
      _
    $region35: #{tpu_custom_call.1} parent=1 // pred_check_branch
      %75 = sbr.rel (0) target = $region37
    $region36: #{tpu_custom_call.1} parent=1 // pred_region
      %77 = dma.done [#allocation6], 128
    $region37: #{tpu_custom_call.1} parent=1 // pred_fallthru
      _
    // Predicated region
    $region38: #{tpu_custom_call.1} parent=1 // pred_check
      _
    $region39: #{tpu_custom_call.1} parent=1 // pred_check_branch
      %79 = sbr.rel (0) target = $region41
    $region40: #{tpu_custom_call.1} parent=1 // pred_region
      %81 = dma.done [#allocation6], 2048
    $region41: #{tpu_custom_call.1} parent=1 // pred_fallthru
      _
    // Predicated region
    $region42: #{tpu_custom_call.1} parent=1 // pred_check
      _
    $region43: #{tpu_custom_call.1} parent=1 // pred_check_branch
      %83 = sbr.rel (0) target = $region45
    $region44: #{tpu_custom_call.1} parent=1 // pred_region
      %85 = dma.done [#allocation9], 2048
    $region45: #{tpu_custom_call.1} parent=1 // pred_fallthru
      _
    %v86 = vld [vmem:[#allocation2] sm:$0xf]
    %v87 = vld [vmem:[#allocation5] sm:$0xff]
    %v88 = vld [vmem:[%s2] sm:$0x1]
    %v90 = vperm.slane %v88, 0
    %vm92 = vcmask 64512
    %v94 = vsel %vm92, %v86, 0
    %96 = vmatpush.msra.mxu0 0.0
    %97 = vmatpush.msra.mxu0 0.0
    %98 = vmatpush.msra.mxu0 0.0
    %99 = vmatpush.msra.mxu0 0.0
    %100 = vmatpush.msra.mxu0 0.0
    %101 = vmatpush.msra.mxu0 0.0
    %102 = vmatpush.msra.mxu0 0.0
    %103 = vmatpush.msra.mxu0 0.0
    %104 = vmatpush.msra.mxu0 0.0
    %105 = vmatpush.msra.mxu0 0.0
    %106 = vmatpush.msra.mxu0 0.0
    %107 = vmatpush.msra.mxu0 0.0
    %108 = vmatpush.msra.mxu0 0.0
    %109 = vmatpush.msra.mxu0 0.0
    %110 = vmatpush.msra.mxu0 0.0
    %111 = vmatpush.msra.mxu0 %v87
    %112 = vmatmul.f32.gmra.mxu0 %v94
    %v113 = vpop.f32.mrf.mxu0
    %v114 = vadd.f32 %v90, %v113
    %115 = vdwg.mxu0
    %v116 = vmax.f32 %v114, 0.0
    %v117 = vld [vmem:[#allocation7] sm:$0xff]
    %v118 = vld [vmem:[#allocation7 + $0x8] sm:$0xff]
    %v119 = vld [vmem:[#allocation7 + $0x10] sm:$0xff]
    %v120 = vld [vmem:[#allocation7 + $0x18] sm:$0xff]
    %v121 = vld [vmem:[#allocation7 + $0x20] sm:$0xff]
    %v122 = vld [vmem:[#allocation7 + $0x28] sm:$0xff]
    %v123 = vld [vmem:[#allocation7 + $0x30] sm:$0xff]
    %v124 = vld [vmem:[#allocation7 + $0x38] sm:$0xff]
    %v125 = vld [vmem:[#allocation7 + $0x40] sm:$0xff]
    %v126 = vld [vmem:[#allocation7 + $0x48] sm:$0xff]
    %v127 = vld [vmem:[#allocation7 + $0x50] sm:$0xff]
    %v128 = vld [vmem:[#allocation7 + $0x58] sm:$0xff]
    %v129 = vld [vmem:[#allocation7 + $0x60] sm:$0xff]
    %v130 = vld [vmem:[#allocation7 + $0x68] sm:$0xff]
    %v131 = vld [vmem:[#allocation7 + $0x70] sm:$0xff]
    %v132 = vld [vmem:[#allocation7 + $0x78] sm:$0xff]
    %v133 = vld [vmem:[%s4] sm:$0x1]
    %v135 = vperm.slane %v133, 0
    %137 = vmatpush.msra.mxu0 %v132
    %138 = vmatpush.msra.mxu0 %v131
    %139 = vmatpush.msra.mxu0 %v130
    %140 = vmatpush.msra.mxu0 %v129
    %141 = vmatpush.msra.mxu0 %v128
    %142 = vmatpush.msra.mxu0 %v127
    %143 = vmatpush.msra.mxu0 %v126
    %144 = vmatpush.msra.mxu0 %v125
    %145 = vmatpush.msra.mxu0 %v124
    %146 = vmatpush.msra.mxu0 %v123
    %147 = vmatpush.msra.mxu0 %v122
    %148 = vmatpush.msra.mxu0 %v121
    %149 = vmatpush.msra.mxu0 %v120
    %150 = vmatpush.msra.mxu0 %v119
    %151 = vmatpush.msra.mxu0 %v118
    %152 = vmatpush.msra.mxu0 %v117
    %153 = vmatmul.f32.gmra.mxu0 %v116
    %v154 = vpop.f32.mrf.mxu0
    %v155 = vadd.f32 %v135, %v154
    %156 = vdwg.mxu0
    %v157 = vmax.f32 %v155, 0.0
    %v158 = vld [vmem:[#allocation8] sm:$0xff]
    %v159 = vld [vmem:[#allocation8 + $0x8] sm:$0xff]
    %v160 = vld [vmem:[#allocation8 + $0x10] sm:$0xff]
    %v161 = vld [vmem:[#allocation8 + $0x18] sm:$0xff]
    %v162 = vld [vmem:[#allocation8 + $0x20] sm:$0xff]
    %v163 = vld [vmem:[#allocation8 + $0x28] sm:$0xff]
    %v164 = vld [vmem:[#allocation8 + $0x30] sm:$0xff]
    %v165 = vld [vmem:[#allocation8 + $0x38] sm:$0xff]
    %v166 = vld [vmem:[#allocation8 + $0x40] sm:$0xff]
    %v167 = vld [vmem:[#allocation8 + $0x48] sm:$0xff]
    %v168 = vld [vmem:[#allocation8 + $0x50] sm:$0xff]
    %v169 = vld [vmem:[#allocation8 + $0x58] sm:$0xff]
    %v170 = vld [vmem:[#allocation8 + $0x60] sm:$0xff]
    %v171 = vld [vmem:[#allocation8 + $0x68] sm:$0xff]
    %v172 = vld [vmem:[#allocation8 + $0x70] sm:$0xff]
    %v173 = vld [vmem:[#allocation8 + $0x78] sm:$0xff]
    %v174 = vld [vmem:[%s6] sm:$0x1]
    %v176 = vperm.slane %v174, 0
    %178 = vmatpush.msra.mxu0 %v173
    %179 = vmatpush.msra.mxu0 %v172
    %180 = vmatpush.msra.mxu0 %v171
    %181 = vmatpush.msra.mxu0 %v170
    %182 = vmatpush.msra.mxu0 %v169
    %183 = vmatpush.msra.mxu0 %v168
    %184 = vmatpush.msra.mxu0 %v167
    %185 = vmatpush.msra.mxu0 %v166
    %186 = vmatpush.msra.mxu0 %v165
    %187 = vmatpush.msra.mxu0 %v164
    %188 = vmatpush.msra.mxu0 %v163
    %189 = vmatpush.msra.mxu0 %v162
    %190 = vmatpush.msra.mxu0 %v161
    %191 = vmatpush.msra.mxu0 %v160
    %192 = vmatpush.msra.mxu0 %v159
    %193 = vmatpush.msra.mxu0 %v158
    %194 = vmatmul.f32.gmra.mxu0 %v157
    %v195 = vpop.f32.mrf.mxu0
    %v196 = vadd.f32 %v176, %v195
    %197 = vdwg.mxu0
    %198 = vst [vmem:[#allocation10] sm:$0xf] %v196
    // Predicated region
    $region46: #{tpu_custom_call.1} parent=1 // pred_check
      _
    $region47: #{tpu_custom_call.1} parent=1 // pred_check_branch
      %200 = sbr.rel (0) target = $region49
    $region48: #{tpu_custom_call.1} parent=1 // pred_region
      %202 = vsyncadd [#allocation4], 0
      %s204 = sshll.u32 [#allocation10], 4
      %s205 = int_to_ptr.vmem [resolvable:$true] %s204
      %s206 = sshll.u32 %s7, 4
      %s207 = int_to_ptr.hbm [resolvable:$true] %s206
      %209 = dma.vmem_to_hbm [thread:$0]  %s205, 64, %s207, [#allocation4]
    $region49: #{tpu_custom_call.1} parent=1 // pred_fallthru
      _
    // Predicated region
    $region50: #{tpu_custom_call.1} parent=1 // pred_check
      _
    $region51: #{tpu_custom_call.1} parent=1 // pred_check_branch
      %211 = sbr.rel (0) target = $region53
    $region52: #{tpu_custom_call.1} parent=1 // pred_region
      %213 = dma.done [#allocation4], 64
    $region53: #{tpu_custom_call.1} parent=1 // pred_fallthru
      _
    %214 = vsyncpa [#allocation3], 1
    %215 = vsyncpa [#allocation6], 1
    %216 = vsyncpa [#allocation9], 1
    %217 = vsyncpa [#allocation4], 1

</llo_original>
